<compile_context>
chip_gen: v5e
topology: v5e:2x2
jax: 0.10.0
libtpu: 0.0.40
codegen_flags: <defaults>
</compile_context>

<pallas_src>
import functools
import math

import jax
import jax.numpy as jnp
from jax import lax
from jax.experimental import pallas as pl
from jax.experimental.pallas import tpu as pltpu

F32 = jnp.float32
BF16 = jnp.bfloat16
_VMEM_LIMIT = 48 * 1024 * 1024   # raise scoped VMEM (defaults: 16/32 MiB)


# ----------------------------------------------------------------------------
# helpers
# ----------------------------------------------------------------------------
def _cparams(*sem):
    return pltpu.CompilerParams(dimension_semantics=sem,
                                vmem_limit_bytes=_VMEM_LIMIT)


def _row_tile(M, max_tm=512):
    """Row tile for (M, ...) operands. Big tiles (<=512) amortize per-step
    overhead; always >=2 grid steps so both v7x TensorCores get work; multiples
    of 16 keep bf16 sublane packing clean. Partial last tiles are fine: every
    per-row op (LayerNorm/softmax) is row-local and stores are clipped."""
    if M <= 16:
        return M, 1
    tm = min(M, max_tm)
    if tm == M:
        tm = min(M, ((M + 1) // 2 + 15) // 16 * 16)
    return tm, pl.cdiv(M, tm)


def _layernorm(x, g, b, eps=1e-5):
    x = x.astype(F32)
    mu = jnp.mean(x, axis=-1, keepdims=True)
    var = jnp.mean(jnp.square(x - mu), axis=-1, keepdims=True)
    return (x - mu) * lax.rsqrt(var + eps) * g.astype(F32) + b.astype(F32)


def _dot(a, b, dims):
    # bf16 MXU operands, f32 accumulation.
    return lax.dot_general(a.astype(BF16), b.astype(BF16), (dims, ((), ())),
                           preferred_element_type=F32)


def _mm(a, b):    # a @ b
    return _dot(a, b, ((1,), (0,)))


def _mm_t(a, b):  # a @ b.T  (contract trailing dims)
    return _dot(a, b, ((1,), (1,)))


def _mm_0(a, b):  # a.T @ b  (contract leading dims)
    return _dot(a, b, ((0,), (0,)))


# ----------------------------------------------------------------------------
# kernels
# ----------------------------------------------------------------------------
def _attn1_qkv_kernel(x_ref, g_ref, b_ref, w_ref, pe_ref, q_ref, k_ref, v_ref,
                      *, inner):
    # LayerNorm + fused QKV projection; pos-emb added only to q and k columns.
    xn = _layernorm(x_ref[0], g_ref[...], b_ref[...])          # (tm, C)
    y = _mm(xn, w_ref[...])                                    # (tm, 3*inner)
    pe = pe_ref[...].astype(F32)                               # (tm, inner)
    q_ref[0] = (y[:, :inner] + pe).astype(q_ref.dtype)
    k_ref[0] = (y[:, inner:2 * inner] + pe).astype(k_ref.dtype)
    v_ref[0] = y[:, 2 * inner:].astype(v_ref.dtype)


def _mha_oproj_kernel(q_ref, k_ref, v_ref, wo_ref, bo_ref, res_ref, o_ref,
                      *, heads, dim_head, scale):
    # Token attention fused with the output projection + bias + residual.
    q = q_ref[0]                                               # (tq, H*D) bf16
    k = k_ref[0]                                               # (Nk, H*D) bf16
    v = v_ref[0]
    wo = wo_ref[...]                                           # (H*D, C) bf16
    acc = res_ref[0].astype(F32) + bo_ref[...].astype(F32)     # (tq, C)
    for h in range(heads):                                     # static unroll
        lo, hi = h * dim_head, (h + 1) * dim_head
        s = _mm_t(q[:, lo:hi], k[:, lo:hi]) * scale            # (tq, Nk)
        m = jnp.max(s, axis=-1, keepdims=True)
        p = jnp.exp(s - m)
        l = jnp.sum(p, axis=-1, keepdims=True)
        oh = _mm(p, v[:, lo:hi]) * pl.reciprocal(l, approx=True)   # (tq, D)
        acc = acc + _mm(oh, wo[lo:hi, :])                      # fused out-proj
    o_ref[0] = acc.astype(o_ref.dtype)


def _restormer_kernel(x_ref, g_ref, b_ref, w1_ref, wdw_ref, wo_ref, bo_ref,
                      o_ref, *, heads, dim_head, hs, ws):
    # LN + 1x1 conv + 3x3 depthwise conv + channel attention + out-proj + residual.
    inner = heads * dim_head
    c3 = 3 * inner
    n = hs * ws
    x = x_ref[0].astype(F32)                                   # (N, C)
    xn = _layernorm(x, g_ref[...], b_ref[...])
    qkv = _mm(xn, w1_ref[...])                                 # (N, 3*inner) == 1x1 conv
    # 3x3 depthwise conv with the 1-px zero halo built in VMEM (no XLA pad).
    img = qkv.reshape(hs, ws, c3)
    zc = jnp.zeros((hs, 1, c3), F32)
    img = jnp.concatenate([zc, img, zc], axis=1)               # (hs, ws+2, c3)
    zr = jnp.zeros((1, ws + 2, c3), F32)
    img = jnp.concatenate([zr, img, zr], axis=0)               # (hs+2, ws+2, c3)
    wdw = wdw_ref[...].astype(F32)                             # (9, c3)
    acc = jnp.zeros((hs, ws, c3), F32)
    for dy in range(3):
        for dx in range(3):
            tap = wdw[3 * dy + dx:3 * dy + dx + 1, :].reshape(1, 1, c3)
            acc = acc + img[dy:dy + hs, dx:dx + ws, :] * tap
    qkv = acc.reshape(n, c3)
    # Channel ("Restormer") attention; scale = 1/sqrt(N) on the (bh, D, N) layout.
    wo = wo_ref[...]
    out = x + bo_ref[...].astype(F32)
    scale = 1.0 / math.sqrt(n)
    for h in range(heads):
        lo, hi = h * dim_head, (h + 1) * dim_head
        qh = qkv[:, lo:hi]
        kh = qkv[:, inner + lo:inner + hi]
        vh = qkv[:, 2 * inner + lo:2 * inner + hi]             # (N, D)
        s = _mm_0(qh, kh) * scale                              # (D, D)
        m = jnp.max(s, axis=-1, keepdims=True)
        p = jnp.exp(s - m)
        l = jnp.sum(p, axis=-1, keepdims=True)
        p = p * pl.reciprocal(l, approx=True)
        oh = _mm_t(vh, p)                                      # (N, D)
        out = out + _mm(oh, wo[lo:hi, :])                      # fused out-proj
    o_ref[0] = out.astype(o_ref.dtype)


def _ctx_kv_kernel(ctx_ref, wkv_ref, wkvip_ref, k_ref, v_ref, kip_ref, vip_ref,
                   *, add_dim, inner):
    # Main + IP KV projections of the context in a single kernel.
    ctx = ctx_ref[0]                                           # (L, Cc)
    kv = _mm(ctx[add_dim:, :], wkv_ref[...])                   # (L-add, 2*inner)
    kvip = _mm(ctx[:add_dim, :], wkvip_ref[...])               # (add, 2*inner)
    k_ref[0] = kv[:, :inner].astype(k_ref.dtype)
    v_ref[0] = kv[:, inner:].astype(v_ref.dtype)
    kip_ref[0] = kvip[:, :inner].astype(kip_ref.dtype)
    vip_ref[0] = kvip[:, inner:].astype(vip_ref.dtype)


def _cross_attn_kernel(x_ref, g_ref, b_ref, wq_ref, k_ref, v_ref, kip_ref,
                       vip_ref, wip_ref, bip_ref, wo_ref, bo_ref, o_ref,
                       *, heads, dim_head, scale):
    # LN + q-proj + decoupled (main + IP) attention + per-head to_out_ip
    # + out-proj + bias + residual, all in one kernel.
    x = x_ref[0].astype(F32)                                   # (tq, C)
    xn = _layernorm(x, g_ref[...], b_ref[...])
    q = _mm(xn, wq_ref[...])                                   # (tq, H*D)
    k = k_ref[0]
    v = v_ref[0]                                               # (Nk, H*D) bf16
    kip = kip_ref[0]
    vip = vip_ref[0]                                           # (add, H*D) bf16
    wip = wip_ref[...]                                         # (D, D) bf16
    bip = bip_ref[...].astype(F32)                             # (1, D)
    wo = wo_ref[...]                                           # (H*D, C) bf16
    acc = x + bo_ref[...].astype(F32)
    for h in range(heads):
        lo, hi = h * dim_head, (h + 1) * dim_head
        qh = q[:, lo:hi]
        # main branch
        s = _mm_t(qh, k[:, lo:hi]) * scale
        m = jnp.max(s, axis=-1, keepdims=True)
        p = jnp.exp(s - m)
        l = jnp.sum(p, axis=-1, keepdims=True)
        oh = _mm(p, v[:, lo:hi]) * pl.reciprocal(l, approx=True)
        # decoupled image-prompt branch (softmax over add_dim keys)
        sip = _mm_t(qh, kip[:, lo:hi]) * scale
        mip = jnp.max(sip, axis=-1, keepdims=True)
        pip = jnp.exp(sip - mip)
        lip = jnp.sum(pip, axis=-1, keepdims=True)
        oip = _mm(pip, vip[:, lo:hi]) * pl.reciprocal(lip, approx=True)
        oh = oh + _mm(oip, wip) + bip                          # per-head to_out_ip
        acc = acc + _mm(oh, wo[lo:hi, :])                      # fused to_out + residual
    o_ref[0] = acc.astype(o_ref.dtype)


def _ffn_kernel(x_ref, g_ref, b_ref, w1_ref, b1_ref, w2_ref, b2_ref, o_ref,
                *, half):
    # Fused: LayerNorm -> GEGLU -> Linear -> +bias -> +residual.
    # TODO(synk): PyTorch F.gelu defaults to exact erf GELU; tanh approx used here.
    x = x_ref[...].astype(F32)
    xn = _layernorm(x, g_ref[...], b_ref[...])
    h = _mm(xn, w1_ref[...]) + b1_ref[...].astype(F32)
    a = h[:, :half] * jax.nn.gelu(h[:, half:], approximate=True)
    y = _mm(a, w2_ref[...]) + b2_ref[...].astype(F32) + x
    o_ref[...] = y.astype(o_ref.dtype)


# ----------------------------------------------------------------------------
# pallas_call wrappers
# ----------------------------------------------------------------------------
def attn1_qkv_proj(x, gamma, beta, wqkv, pe):
    B, N, C = x.shape
    inner = pe.shape[1]
    tn, nt = _row_tile(N)
    kern = functools.partial(_attn1_qkv_kernel, inner=inner)
    qkv_shape = jax.ShapeDtypeStruct((B, N, inner), BF16)
    return pl.pallas_call(
        kern,
        out_shape=(qkv_shape, qkv_shape, qkv_shape),
        grid_spec=pltpu.PrefetchScalarGridSpec(
            num_scalar_prefetch=0,
            grid=(B, nt),
            in_specs=[pl.BlockSpec((1, tn, C), lambda b, i: (b, i, 0)),
                      pl.BlockSpec((1, C), lambda b, i: (0, 0)),
                      pl.BlockSpec((1, C), lambda b, i: (0, 0)),
                      pl.BlockSpec((C, 3 * inner), lambda b, i: (0, 0)),
                      pl.BlockSpec((tn, inner), lambda b, i: (i, 0))],
            out_specs=(pl.BlockSpec((1, tn, inner), lambda b, i: (b, i, 0)),
                       pl.BlockSpec((1, tn, inner), lambda b, i: (b, i, 0)),
                       pl.BlockSpec((1, tn, inner), lambda b, i: (b, i, 0))),
        ),
        compiler_params=_cparams("parallel", "parallel"),
    )(x, gamma, beta, wqkv, pe)


def mha_out_proj(q, k, v, wo, bo, res, heads, dim_head):
    # TODO(synk): flash-style online-softmax kv loop for long sequences (v7x VMEM).
    B, Nq, inner = q.shape
    _, Nk, _ = k.shape
    C = res.shape[-1]
    tq, nt = _row_tile(Nq)
    kern = functools.partial(_mha_oproj_kernel, heads=heads, dim_head=dim_head,
                             scale=1.0 / math.sqrt(dim_head))
    return pl.pallas_call(
        kern,
        out_shape=jax.ShapeDtypeStruct((B, Nq, C), res.dtype),
        grid_spec=pltpu.PrefetchScalarGridSpec(
            num_scalar_prefetch=0,
            grid=(B, nt),
            in_specs=[pl.BlockSpec((1, tq, inner), lambda b, i: (b, i, 0)),
                      pl.BlockSpec((1, Nk, inner), lambda b, i: (b, 0, 0)),
                      pl.BlockSpec((1, Nk, inner), lambda b, i: (b, 0, 0)),
                      pl.BlockSpec((inner, C), lambda b, i: (0, 0)),
                      pl.BlockSpec((1, C), lambda b, i: (0, 0)),
                      pl.BlockSpec((1, tq, C), lambda b, i: (b, i, 0))],
            out_specs=pl.BlockSpec((1, tq, C), lambda b, i: (b, i, 0)),
        ),
        compiler_params=_cparams("parallel", "parallel"),
    )(q, k, v, wo, bo, res)


def restormer_block(x, gamma, beta, w1x1, wdw, wo, bo, heads, dim_head, hs, ws):
    B, N, C = x.shape
    inner = heads * dim_head
    kern = functools.partial(_restormer_kernel, heads=heads, dim_head=dim_head,
                             hs=hs, ws=ws)
    # TODO(synk): spatial-tile the grid over (hs, ws) with a 1-px halo for
    #             production N so the working set fits v7x's 64 MiB VMEM.
    return pl.pallas_call(
        kern,
        out_shape=jax.ShapeDtypeStruct((B, N, C), x.dtype),
        grid_spec=pltpu.PrefetchScalarGridSpec(
            num_scalar_prefetch=0,
            grid=(B,),
            in_specs=[pl.BlockSpec((1, N, C), lambda b: (b, 0, 0)),
                      pl.BlockSpec((1, C), lambda b: (0, 0)),
                      pl.BlockSpec((1, C), lambda b: (0, 0)),
                      pl.BlockSpec((C, 3 * inner), lambda b: (0, 0)),
                      pl.BlockSpec((9, 3 * inner), lambda b: (0, 0)),
                      pl.BlockSpec((inner, C), lambda b: (0, 0)),
                      pl.BlockSpec((1, C), lambda b: (0, 0))],
            out_specs=pl.BlockSpec((1, N, C), lambda b: (b, 0, 0)),
        ),
        compiler_params=_cparams("parallel"),
    )(x, gamma, beta, w1x1, wdw, wo, bo)


def ctx_kv_proj(context, wkv, wkv_ip, add_dim, inner):
    B, L, Cc = context.shape
    Lm = L - add_dim
    kern = functools.partial(_ctx_kv_kernel, add_dim=add_dim, inner=inner)
    kv_shape = jax.ShapeDtypeStruct((B, Lm, inner), BF16)
    ip_shape = jax.ShapeDtypeStruct((B, add_dim, inner), BF16)
    return pl.pallas_call(
        kern,
        out_shape=(kv_shape, kv_shape, ip_shape, ip_shape),
        grid_spec=pltpu.PrefetchScalarGridSpec(
            num_scalar_prefetch=0,
            grid=(B,),
            in_specs=[pl.BlockSpec((1, L, Cc), lambda b: (b, 0, 0)),
                      pl.BlockSpec((Cc, 2 * inner), lambda b: (0, 0)),
                      pl.BlockSpec((Cc, 2 * inner), lambda b: (0, 0))],
            out_specs=(pl.BlockSpec((1, Lm, inner), lambda b: (b, 0, 0)),
                       pl.BlockSpec((1, Lm, inner), lambda b: (b, 0, 0)),
                       pl.BlockSpec((1, add_dim, inner), lambda b: (b, 0, 0)),
                       pl.BlockSpec((1, add_dim, inner), lambda b: (b, 0, 0))),
        ),
        compiler_params=_cparams("parallel"),
    )(context, wkv, wkv_ip)


def cross_attn_block(x, gamma, beta, wq, k, v, kip, vip, wip, bip, wo, bo,
                     heads, dim_head):
    B, N, C = x.shape
    inner = heads * dim_head
    Nk = k.shape[1]
    add = kip.shape[1]
    tq, nt = _row_tile(N)
    kern = functools.partial(_cross_attn_kernel, heads=heads, dim_head=dim_head,
                             scale=1.0 / math.sqrt(dim_head))
    return pl.pallas_call(
        kern,
        out_shape=jax.ShapeDtypeStruct((B, N, C), x.dtype),
        grid_spec=pltpu.PrefetchScalarGridSpec(
            num_scalar_prefetch=0,
            grid=(B, nt),
            in_specs=[pl.BlockSpec((1, tq, C), lambda b, i: (b, i, 0)),
                      pl.BlockSpec((1, C), lambda b, i: (0, 0)),
                      pl.BlockSpec((1, C), lambda b, i: (0, 0)),
                      pl.BlockSpec((C, inner), lambda b, i: (0, 0)),
                      pl.BlockSpec((1, Nk, inner), lambda b, i: (b, 0, 0)),
                      pl.BlockSpec((1, Nk, inner), lambda b, i: (b, 0, 0)),
                      pl.BlockSpec((1, add, inner), lambda b, i: (b, 0, 0)),
                      pl.BlockSpec((1, add, inner), lambda b, i: (b, 0, 0)),
                      pl.BlockSpec((dim_head, dim_head), lambda b, i: (0, 0)),
                      pl.BlockSpec((1, dim_head), lambda b, i: (0, 0)),
                      pl.BlockSpec((inner, C), lambda b, i: (0, 0)),
                      pl.BlockSpec((1, C), lambda b, i: (0, 0))],
            out_specs=pl.BlockSpec((1, tq, C), lambda b, i: (b, i, 0)),
        ),
        compiler_params=_cparams("parallel", "parallel"),
    )(x, gamma, beta, wq, k, v, kip, vip, wip, bip, wo, bo)


def feed_forward(x, gamma, beta, w1, b1, w2, b2):
    M, C = x.shape
    F2 = w1.shape[1]
    Fh = w2.shape[0]
    tm, nt = _row_tile(M)
    # TODO(synk): for v7x + large dim, add an "arbitrary" K-grid axis over the
    #             GEGLU hidden dim with a VMEM accumulator so the FFN weights
    #             need not be fully VMEM-resident.
    kern = functools.partial(_ffn_kernel, half=Fh)
    return pl.pallas_call(
        kern,
        out_shape=jax.ShapeDtypeStruct((M, C), x.dtype),
        grid_spec=pltpu.PrefetchScalarGridSpec(
            num_scalar_prefetch=0,
            grid=(nt,),
            in_specs=[pl.BlockSpec((tm, C), lambda i: (i, 0)),
                      pl.BlockSpec((1, C), lambda i: (0, 0)),
                      pl.BlockSpec((1, C), lambda i: (0, 0)),
                      pl.BlockSpec((C, F2), lambda i: (0, 0)),
                      pl.BlockSpec((1, F2), lambda i: (0, 0)),
                      pl.BlockSpec((Fh, C), lambda i: (0, 0)),
                      pl.BlockSpec((1, C), lambda i: (0, 0))],
            out_specs=pl.BlockSpec((tm, C), lambda i: (i, 0)),
        ),
        compiler_params=_cparams("parallel"),
    )(x, gamma, beta, w1, b1, w2, b2)


# ----------------------------------------------------------------------------
# one-time parameter preparation (fusions / casts done at init, not per forward)
# ----------------------------------------------------------------------------
def prepare_params(params, heads, wdtype=BF16):
    def w(t):
        return t.astype(wdtype)

    def row(t):
        return t.reshape(1, -1).astype(F32)

    p1, pT, p2, pf = params["attn1"], params["attnT"], params["attn2"], params["ff"]
    return {
        "norm1": (row(params["norm1"]["g"]), row(params["norm1"]["b"])),
        "normT": (row(params["normT"]["g"]), row(params["normT"]["b"])),
        "norm2": (row(params["norm2"]["g"]), row(params["norm2"]["b"])),
        "norm3": (row(params["norm3"]["g"]), row(params["norm3"]["b"])),
        "attn1": {
            "wqkv": w(jnp.concatenate([p1["wq"], p1["wk"], p1["wv"]], axis=-1)),
            "pe": jnp.tile(p1["pos_emb"], (1, heads)).astype(F32),
            "wo": w(p1["wo"]), "bo": row(p1["bo"]),
        },
        "attnT": {
            "w1x1": w(pT["w_qkv1x1"]),
            "wdw": pT["w_dw"].reshape(9, -1).astype(F32),
            "wo": w(pT["wo"]), "bo": row(pT["bo"]),
        },
        "attn2": {
            "wq": w(p2["wq"]),
            "wkv": w(jnp.concatenate([p2["wk"], p2["wv"]], axis=-1)),
            "wkv_ip": w(jnp.concatenate([p2["wk_ip"], p2["wv_ip"]], axis=-1)),
            "wip": w(p2["w_out_ip"]), "bip": row(p2["b_out_ip"]),
            "wo": w(p2["wo"]), "bo": row(p2["bo"]),
        },
        "ff": {"w1": w(pf["w1"]), "b1": row(pf["b1"]),
               "w2": w(pf["w2"]), "b2": row(pf["b2"])},
    }


# ----------------------------------------------------------------------------
# full block forward (eval mode: dropout = identity, checkpoint = identity)
# ----------------------------------------------------------------------------
def hybrid_block_forward(x, context, prep, heads, dim_head, add_dim=1):
    B, N, C = x.shape
    inner = heads * dim_head
    hs = int(round(math.sqrt(N)))
    ws = N // hs
    assert hs * ws == N

    # ---- attn1: self-attention with positional embedding --------------------
    g, b = prep["norm1"]
    p = prep["attn1"]
    q, k, v = attn1_qkv_proj(x, g, b, p["wqkv"], p["pe"])
    x = mha_out_proj(q, k, v, p["wo"], p["bo"], x, heads, dim_head)

    # ---- attnT: Restormer channel attention (single fused kernel) -----------
    g, b = prep["normT"]
    p = prep["attnT"]
    x = restormer_block(x, g, b, p["w1x1"], p["wdw"], p["wo"], p["bo"],
                        heads, dim_head, hs, ws)

    # ---- attn2: decoupled cross-attention with IP branch ---------------------
    g, b = prep["norm2"]
    p = prep["attn2"]
    k, v, kip, vip = ctx_kv_proj(context, p["wkv"], p["wkv_ip"], add_dim, inner)
    x = cross_attn_block(x, g, b, p["wq"], k, v, kip, vip,
                         p["wip"], p["bip"], p["wo"], p["bo"], heads, dim_head)

    # ---- FeedForward (GEGLU) --------------------------------------------------
    g, b = prep["norm3"]
    p = prep["ff"]
    x = feed_forward(x.reshape(B * N, C), g, b,
                     p["w1"], p["b1"], p["w2"], p["b2"]).reshape(B, N, C)
    return x


# ----------------------------------------------------------------------------
# parameters
# ----------------------------------------------------------------------------
def init_params(key, dim, ctx_dim, heads, dim_head, seq_len, dtype=jnp.float32):
    inner = heads * dim_head
    ff_inner = 4 * dim
    it = iter(jax.random.split(key, 40))

    def dense(shape):
        return jax.random.normal(next(it), shape, dtype) / math.sqrt(shape[0])

    def bias(n):
        return 0.05 * jax.random.normal(next(it), (n,), dtype)

    def norm():
        return {"g": 1.0 + 0.1 * jax.random.normal(next(it), (dim,), dtype),
                "b": 0.1 * jax.random.normal(next(it), (dim,), dtype)}

    return {
        "norm1": norm(), "normT": norm(), "norm2": norm(), "norm3": norm(),
        "attn1": {
            "pos_emb": 0.1 * jax.random.normal(next(it), (seq_len, dim_head), dtype),
            "wq": dense((dim, inner)), "wk": dense((dim, inner)), "wv": dense((dim, inner)),
            "wo": dense((inner, dim)), "bo": bias(dim),
        },
        "attnT": {
            "w_qkv1x1": dense((dim, 3 * inner)),
            "w_dw": jax.random.normal(next(it), (3, 3, 3 * inner), dtype) / 3.0,
            "wo": dense((inner, dim)), "bo": bias(dim),
        },
        "attn2": {
            "wq": dense((dim, inner)),
            "wk": dense((ctx_dim, inner)), "wv": dense((ctx_dim, inner)),
            "wk_ip": dense((ctx_dim, inner)), "wv_ip": dense((ctx_dim, inner)),
            "w_out_ip": dense((dim_head, dim_head)), "b_out_ip": bias(dim_head),
            "wo": dense((inner, dim)), "bo": bias(dim),
        },
        "ff": {
            "w1": dense((dim, 2 * ff_inner)), "b1": bias(2 * ff_inner),
            "w2": dense((ff_inner, dim)), "b2": bias(dim),
        },
    }


# ----------------------------------------------------------------------------
# pure-JAX reference (mirrors the PyTorch forward op-for-op, f32)
# ----------------------------------------------------------------------------
def reference_forward(x, context, params, heads, dim_head, add_dim=1):
    B, N, C = x.shape
    inner = heads * dim_head
    Hs = int(round(math.sqrt(N)))
    Ws = N // Hs

    def ln(t, g, b, eps=1e-5):
        mu = t.mean(-1, keepdims=True)
        var = ((t - mu) ** 2).mean(-1, keepdims=True)
        return (t - mu) / jnp.sqrt(var + eps) * g + b

    def split_heads(t):
        return t.reshape(B, t.shape[1], heads, dim_head).transpose(0, 2, 1, 3)

    def attention(q, k, v):
        s = jnp.einsum("bhqd,bhkd->bhqk", q, k) / math.sqrt(q.shape[-1])
        return jnp.einsum("bhqk,bhkd->bhqd", jax.nn.softmax(s, -1), v)

    # attn1
    p = params["attn1"]
    h = ln(x, params["norm1"]["g"], params["norm1"]["b"])
    pe = jnp.tile(p["pos_emb"], (1, heads))[None]
    q, k, v = h @ p["wq"] + pe, h @ p["wk"] + pe, h @ p["wv"]
    o = attention(split_heads(q), split_heads(k), split_heads(v))
    o = o.transpose(0, 2, 1, 3).reshape(B, N, inner)
    x = o @ p["wo"] + p["bo"] + x
    # attnT
    p = params["attnT"]
    h = ln(x, params["normT"]["g"], params["normT"]["b"])
    qkv = (h @ p["w_qkv1x1"]).reshape(B, Hs, Ws, 3 * inner)
    pad = jnp.pad(qkv, ((0, 0), (1, 1), (1, 1), (0, 0)))
    dw = jnp.zeros_like(qkv)
    for dy in range(3):
        for dx in range(3):
            dw = dw + pad[:, dy:dy + Hs, dx:dx + Ws, :] * p["w_dw"][dy, dx][None, None, None, :]
    dw = dw.reshape(B, N, 3 * inner)
    q, k, v = dw[..., :inner], dw[..., inner:2 * inner], dw[..., 2 * inner:]
    qh = q.reshape(B, N, heads, dim_head)
    kh = k.reshape(B, N, heads, dim_head)
    vh = v.reshape(B, N, heads, dim_head)
    s = jnp.einsum("bnhd,bnhe->bhde", qh, kh) / math.sqrt(N)
    o = jnp.einsum("bhde,bnhe->bnhd", jax.nn.softmax(s, -1), vh).reshape(B, N, inner)
    x = o @ p["wo"] + p["bo"] + x
    # attn2
    p = params["attn2"]
    h = ln(x, params["norm2"]["g"], params["norm2"]["b"])
    q = h @ p["wq"]
    k = context[:, add_dim:, :] @ p["wk"]
    v = context[:, add_dim:, :] @ p["wv"]
    k_ip = context[:, :add_dim, :] @ p["wk_ip"]
    v_ip = context[:, :add_dim, :] @ p["wv_ip"]
    o = attention(split_heads(q), split_heads(k), split_heads(v))
    o_ip = attention(split_heads(q), split_heads(k_ip), split_heads(v_ip))
    o = o + (o_ip @ p["w_out_ip"] + p["b_out_ip"])
    o = o.transpose(0, 2, 1, 3).reshape(B, N, inner)
    x = o @ p["wo"] + p["bo"] + x
    # ff (GEGLU; tanh-approx gelu to match kernel)
    p = params["ff"]
    h = ln(x, params["norm3"]["g"], params["norm3"]["b"])
    hp = h @ p["w1"] + p["b1"]
    half = p["w2"].shape[0]
    h = hp[..., :half] * jax.nn.gelu(hp[..., half:], approximate=True)
    x = h @ p["w2"] + p["b2"] + x
    return x


# ----------------------------------------------------------------------------
if __name__ == "__main__":
    B, dim, heads, dim_head = 2, 32, 4, 8
    Hs = Ws = 8
    N = Hs * Ws                      # spatial_size = 64 tokens
    ctx_dim = 32
    add_dim = 1
    ctx_len = 77 + add_dim           # module asserts context.shape[1] == 77 + add_dim

    key = jax.random.PRNGKey(0)
    kx, kc, kp = jax.random.split(key, 3)
    x = jax.random.normal(kx, (B, N, dim), jnp.float32)
    context = jax.random.normal(kc, (B, ctx_len, ctx_dim), jnp.float32)
    params = init_params(kp, dim, ctx_dim, heads, dim_head, N)
    prep = prepare_params(params, heads)      # fuse / cast weights once

    y = hybrid_block_forward(x, context, prep, heads, dim_head, add_dim)
    y = jax.block_until_ready(y)
    assert y.shape == (B, N, dim)
    assert bool(jnp.all(jnp.isfinite(y)))

    with jax.default_matmul_precision("float32"):
        y_ref = reference_forward(x, context, params, heads, dim_head, add_dim)
    y_ref = jax.block_until_ready(y_ref)

    diff = y - y_ref
    rel = float(jnp.sqrt(jnp.sum(diff * diff) / jnp.sum(y_ref * y_ref)))
    max_err = float(jnp.max(jnp.abs(diff)))
    # Tolerance accounts for bf16 MXU operands + approximate softmax reciprocal
    # vs the pure-f32 reference; real structural errors give rel ~ O(1).
    assert rel < 3e-2 and max_err < 0.3, (
        f"mismatch vs reference: rel Frobenius {rel}, max abs {max_err}")

    print("KERNEL_OK")
</pallas_src>

<mosaic_0001>
module attributes {stable_mosaic.version = 11 : i64} {
  func.func @_attn1_qkv_kernel(%arg0: i32, %arg1: i32, %arg2: memref<1x32x32xf32, #tpu.memory_space<vmem>>, %arg3: memref<1x32xf32, #tpu.memory_space<vmem>>, %arg4: memref<1x32xf32, #tpu.memory_space<vmem>>, %arg5: memref<32x96xbf16, #tpu.memory_space<vmem>>, %arg6: memref<32x32xf32, #tpu.memory_space<vmem>>, %arg7: memref<1x32x32xbf16, #tpu.memory_space<vmem>>, %arg8: memref<1x32x32xbf16, #tpu.memory_space<vmem>>, %arg9: memref<1x32x32xbf16, #tpu.memory_space<vmem>>) attributes {dimension_semantics = [#tpu.dimension_semantics<parallel>, #tpu.dimension_semantics<parallel>], iteration_bounds = array<i64: 2, 2>, scalar_prefetch = 0 : i64, scratch_operands = 0 : i64, tpu.core_type = #tpu.core_type<tc>, window_params = [{transform_indices = @transform_0, window_bounds = array<i64: 1, 32, 32>}, {pipeline_mode = #tpu.pipeline_mode<synchronous>, transform_indices = @transform_1, window_bounds = array<i64: 1, 32>}, {pipeline_mode = #tpu.pipeline_mode<synchronous>, transform_indices = @transform_2, window_bounds = array<i64: 1, 32>}, {pipeline_mode = #tpu.pipeline_mode<synchronous>, transform_indices = @transform_3, window_bounds = array<i64: 32, 96>}, {transform_indices = @transform_4, window_bounds = array<i64: 32, 32>}, {transform_indices = @transform_5, window_bounds = array<i64: 1, 32, 32>}, {transform_indices = @transform_6, window_bounds = array<i64: 1, 32, 32>}, {transform_indices = @transform_7, window_bounds = array<i64: 1, 32, 32>}]} {
    %c0 = arith.constant 0 : index
    %c0_0 = arith.constant 0 : index
    %c0_1 = arith.constant 0 : index
    %0 = vector.load %arg2[%c0, %c0_0, %c0_1] : memref<1x32x32xf32, #tpu.memory_space<vmem>>, vector<1x32x32xf32>
    %1 = vector.shape_cast %0 : vector<1x32x32xf32> to vector<32x32xf32>
    %c0_2 = arith.constant 0 : index
    %c0_3 = arith.constant 0 : index
    %2 = vector.load %arg3[%c0_2, %c0_3] : memref<1x32xf32, #tpu.memory_space<vmem>>, vector<1x32xf32>
    %c0_4 = arith.constant 0 : index
    %c0_5 = arith.constant 0 : index
    %3 = vector.load %arg4[%c0_4, %c0_5] : memref<1x32xf32, #tpu.memory_space<vmem>>, vector<1x32xf32>
    %cst = arith.constant dense<0.000000e+00> : vector<32xf32>
    %4 = vector.multi_reduction <add>, %1, %cst [1] : vector<32x32xf32> to vector<32xf32>
    %5 = vector.shape_cast %4 : vector<32xf32> to vector<32x1xf32>
    %cst_6 = arith.constant 3.200000e+01 : f32
    %6 = vector.broadcast %cst_6 : f32 to vector<32x1xf32>
    %7 = arith.divf %5, %6 : vector<32x1xf32>
    %8 = vector.broadcast %7 : vector<32x1xf32> to vector<32x32xf32>
    %9 = arith.subf %1, %8 : vector<32x32xf32>
    %10 = arith.mulf %9, %9 : vector<32x32xf32>
    %cst_7 = arith.constant dense<0.000000e+00> : vector<32xf32>
    %11 = vector.multi_reduction <add>, %10, %cst_7 [1] : vector<32x32xf32> to vector<32xf32>
    %12 = vector.shape_cast %11 : vector<32xf32> to vector<32x1xf32>
    %cst_8 = arith.constant 3.200000e+01 : f32
    %13 = vector.broadcast %cst_8 : f32 to vector<32x1xf32>
    %14 = arith.divf %12, %13 : vector<32x1xf32>
    %15 = vector.broadcast %7 : vector<32x1xf32> to vector<32x32xf32>
    %16 = arith.subf %1, %15 : vector<32x32xf32>
    %cst_9 = arith.constant 9.99999974E-6 : f32
    %17 = vector.broadcast %cst_9 : f32 to vector<32x1xf32>
    %18 = arith.addf %14, %17 : vector<32x1xf32>
    %19 = math.rsqrt %18 : vector<32x1xf32>
    %20 = vector.broadcast %19 : vector<32x1xf32> to vector<32x32xf32>
    %21 = arith.mulf %16, %20 : vector<32x32xf32>
    %22 = vector.broadcast %2 : vector<1x32xf32> to vector<32x32xf32>
    %23 = arith.mulf %21, %22 : vector<32x32xf32>
    %24 = vector.broadcast %3 : vector<1x32xf32> to vector<32x32xf32>
    %25 = arith.addf %23, %24 : vector<32x32xf32>
    %c0_10 = arith.constant 0 : index
    %c0_11 = arith.constant 0 : index
    %26 = vector.load %arg5[%c0_10, %c0_11] : memref<32x96xbf16, #tpu.memory_space<vmem>>, vector<32x96xbf16>
    %27 = arith.truncf %25 : vector<32x32xf32> to vector<32x32xbf16>
    %cst_12 = arith.constant dense<0.000000e+00> : vector<32x96xf32>
    %28 = tpu.matmul %27, %26, %cst_12 {dimension_numbers = #tpu.dot_dimension_numbers<[1], [0], [0], [1], [0, 0, 1, 1], [], []>} : vector<32x32xbf16>, vector<32x96xbf16>, vector<32x96xf32> -> vector<32x96xf32>
    %c0_13 = arith.constant 0 : index
    %c0_14 = arith.constant 0 : index
    %29 = vector.load %arg6[%c0_13, %c0_14] : memref<32x32xf32, #tpu.memory_space<vmem>>, vector<32x32xf32>
    %30 = vector.extract_strided_slice %28 {offsets = [0, 0], sizes = [32, 32], strides = [1, 1]} : vector<32x96xf32> to vector<32x32xf32>
    %31 = arith.addf %30, %29 : vector<32x32xf32>
    %32 = arith.truncf %31 : vector<32x32xf32> to vector<32x32xbf16>
    %c0_15 = arith.constant 0 : index
    %c0_16 = arith.constant 0 : index
    %c0_17 = arith.constant 0 : index
    %33 = vector.load %arg7[%c0_15, %c0_16, %c0_17] : memref<1x32x32xbf16, #tpu.memory_space<vmem>>, vector<1x32x32xbf16>
    %34 = vector.shape_cast %33 : vector<1x32x32xbf16> to vector<32x32xbf16>
    %35 = vector.shape_cast %32 : vector<32x32xbf16> to vector<1x32x32xbf16>
    tpu.vector_store %arg7[%c0_15, %c0_16, %c0_17], %35 {strides = array<i32>} : memref<1x32x32xbf16, #tpu.memory_space<vmem>>, vector<1x32x32xbf16>,
    %36 = vector.extract_strided_slice %28 {offsets = [0, 32], sizes = [32, 32], strides = [1, 1]} : vector<32x96xf32> to vector<32x32xf32>
    %37 = arith.addf %36, %29 : vector<32x32xf32>
    %38 = arith.truncf %37 : vector<32x32xf32> to vector<32x32xbf16>
    %c0_18 = arith.constant 0 : index
    %c0_19 = arith.constant 0 : index
    %c0_20 = arith.constant 0 : index
    %39 = vector.load %arg8[%c0_18, %c0_19, %c0_20] : memref<1x32x32xbf16, #tpu.memory_space<vmem>>, vector<1x32x32xbf16>
    %40 = vector.shape_cast %39 : vector<1x32x32xbf16> to vector<32x32xbf16>
    %41 = vector.shape_cast %38 : vector<32x32xbf16> to vector<1x32x32xbf16>
    tpu.vector_store %arg8[%c0_18, %c0_19, %c0_20], %41 {strides = array<i32>} : memref<1x32x32xbf16, #tpu.memory_space<vmem>>, vector<1x32x32xbf16>,
    %42 = vector.extract_strided_slice %28 {offsets = [0, 64], sizes = [32, 32], strides = [1, 1]} : vector<32x96xf32> to vector<32x32xf32>
    %43 = arith.truncf %42 : vector<32x32xf32> to vector<32x32xbf16>
    %c0_21 = arith.constant 0 : index
    %c0_22 = arith.constant 0 : index
    %c0_23 = arith.constant 0 : index
    %44 = vector.load %arg9[%c0_21, %c0_22, %c0_23] : memref<1x32x32xbf16, #tpu.memory_space<vmem>>, vector<1x32x32xbf16>
    %45 = vector.shape_cast %44 : vector<1x32x32xbf16> to vector<32x32xbf16>
    %46 = vector.shape_cast %43 : vector<32x32xbf16> to vector<1x32x32xbf16>
    tpu.vector_store %arg9[%c0_21, %c0_22, %c0_23], %46 {strides = array<i32>} : memref<1x32x32xbf16, #tpu.memory_space<vmem>>, vector<1x32x32xbf16>,
    return
  }
  func.func @transform_0(%arg0: i32, %arg1: i32) -> (i32, i32, i32) {
    %c0_i32 = arith.constant 0 : i32
    %c0_i32_0 = arith.constant 0 : i32
    return %arg0, %arg1, %c0_i32 : i32, i32, i32
  }
  func.func @transform_1(%arg0: i32, %arg1: i32) -> (i32, i32) {
    %c0_i32 = arith.constant 0 : i32
    %c0_i32_0 = arith.constant 0 : i32
    %c0_i32_1 = arith.constant 0 : i32
    return %c0_i32, %c0_i32_0 : i32, i32
  }
  func.func @transform_2(%arg0: i32, %arg1: i32) -> (i32, i32) {
    %c0_i32 = arith.constant 0 : i32
    %c0_i32_0 = arith.constant 0 : i32
    %c0_i32_1 = arith.constant 0 : i32
    return %c0_i32, %c0_i32_0 : i32, i32
  }
  func.func @transform_3(%arg0: i32, %arg1: i32) -> (i32, i32) {
    %c0_i32 = arith.constant 0 : i32
    %c0_i32_0 = arith.constant 0 : i32
    %c0_i32_1 = arith.constant 0 : i32
    return %c0_i32, %c0_i32_0 : i32, i32
  }
  func.func @transform_4(%arg0: i32, %arg1: i32) -> (i32, i32) {
    %c0_i32 = arith.constant 0 : i32
    %c0_i32_0 = arith.constant 0 : i32
    return %arg1, %c0_i32 : i32, i32
  }
  func.func @transform_5(%arg0: i32, %arg1: i32) -> (i32, i32, i32) {
    %c0_i32 = arith.constant 0 : i32
    %c0_i32_0 = arith.constant 0 : i32
    return %arg0, %arg1, %c0_i32 : i32, i32, i32
  }
  func.func @transform_6(%arg0: i32, %arg1: i32) -> (i32, i32, i32) {
    %c0_i32 = arith.constant 0 : i32
    %c0_i32_0 = arith.constant 0 : i32
    return %arg0, %arg1, %c0_i32 : i32, i32, i32
  }
  func.func @transform_7(%arg0: i32, %arg1: i32) -> (i32, i32, i32) {
    %c0_i32 = arith.constant 0 : i32
    %c0_i32_0 = arith.constant 0 : i32
    return %arg0, %arg1, %c0_i32 : i32, i32, i32
  }
}

</mosaic_0001>

<llo_original>
// kernel: tpu_custom_call.1
$region0: #{tpu_custom_call.1}
  #allocation0 [shape = 'u32[]', space=smem, size = 0x4, offset = 0x4, fixed_abs, tag = 'smem constant byte address 0x4 - core index']
  #allocation1 [shape = 'u32[72,128]{1,0:T(1,128)}', space=vmem, size = 0x9000, scoped, tag = 'internal scratch']
  %s0 = inlined_call_operand.vmem [shape: f32[2,64,32], index: 0, kind: input, shape index: {}]
  %s1 = inlined_call_operand.vmem [shape: f32[1,32], index: 1, kind: input, shape index: {}]
  %s2 = inlined_call_operand.vmem [shape: f32[1,32], index: 2, kind: input, shape index: {}]
  %s3 = inlined_call_operand.vmem [shape: bf16[32,96], index: 3, kind: input, shape index: {}]
  %s4 = inlined_call_operand.vmem [shape: f32[64,32], index: 4, kind: input, shape index: {}]
  %s5 = inlined_call_operand.vmem [shape: bf16[2,64,32], index: 5, kind: output, shape index: {0}]
  %s6 = inlined_call_operand.vmem [shape: bf16[2,64,32], index: 6, kind: output, shape index: {1}]
  %s7 = inlined_call_operand.vmem [shape: bf16[2,64,32], index: 7, kind: output, shape index: {2}]
  %8 = xla_tuple %s5, %s6, %s7
  %s9 = sld [smem:[#allocation0]]
  $region69: #{tpu_custom_call.1} parent=0
    _
  %s11 = ssub.s32 1, %s9
  %s12 = scalar_select 0, %s11, %s9
  loop: start=0, step=1, limit=6
  $region2: #{tpu_custom_call.1} parent=0 // loop_pre_header
    _
  $region3: #{tpu_custom_call.1} parent=0 // loop_header
    %s14 = sphi 0, %s18
    %p15 = scmp.ge.s32.totalorder %s14, 6
    %s21 = sphi 0, %s33
    %s22 = sphi 0, %s29
    %s23 = sphi 0, %s21
    %s24 = sphi 0, %s22
    %s25 = sphi 0, %s23
    %s26 = sphi 0, %s24
    %s38 = sphi 0, %s40
    %s41 = sphi 0, %s38
    %s42 = sphi 0, %s41
    %s58 = sphi 0, %s42
    %s62 = sphi 0, %s62
    %s64 = sphi 0, %s62
    %s65 = sphi 0, %s64
    %s79 = sphi 0, %s65
    %s83 = sphi 0, %s83
    %s85 = sphi 0, %s83
    %s86 = sphi 0, %s85
    %s100 = sphi 0, %s86
    %s104 = sphi 0, %s104
    %s106 = sphi 0, %s104
    %s107 = sphi 0, %s106
    %s121 = sphi 0, %s107
    %s127 = sphi 0, %s129
    %s130 = sphi 0, %s127
    %s131 = sphi 0, %s130
    %s147 = sphi 0, %s131
    %s155 = sphi 0, %s157
    %s158 = sphi 0, %s155
    %s159 = sphi 0, %s158
    %s175 = sphi 0, %s159
    %s183 = sphi 0, %s185
    %s186 = sphi 0, %s183
    %s187 = sphi 0, %s186
    %s203 = sphi 0, %s187
    %s211 = sphi 0, %s213
    %s214 = sphi 0, %s211
    %s215 = sphi 0, %s214
    %s231 = sphi 0, %s215
  $region4: #{tpu_custom_call.1} parent=0 // loop_header_branch
    %17 = sbr.rel (%p15) target = $region8
  $region5: #{tpu_custom_call.1} parent=0 // loop_body
    %s19 = ssub.s32 %s14, 1
    %s20 = ssub.s32 %s14, 2
    %s27 = sadd.s32 1, %s22
    %p28 = scmp.ge.s32.totalorder %s27, 2
    %s29 = scalar_select %p28, 0, %s27
    %s30 = sadd.s32 1, %s21
    %s31 = scalar_select %p28, %s30, %s21
    %p32 = scmp.ge.s32.totalorder %s31, 2
    %s33 = scalar_select %p32, 0, %s31
    %s34 = ssub.s32 %s21, %s33
    %s35 = ssub.s32 %s22, %s29
    %s36 = sor.u32 %s34, %s35
    %p37 = scmp.eq.s32.totalorder %s36, 0
    %s39 = sadd.s32 %s38, 1
    %s40 = scalar_select %p37, %s38, %s39
    %p43 = pneg %p37
    %p44 = scmp.eq.s32.totalorder %s14, 3
    %p45 = por %p43, %p44
    %p46 = scmp.ne.s32.totalorder %s38, %s41
    %p47 = scmp.eq.s32.totalorder %s14, 0
    %p48 = por %p46, %p47
    %p49 = scmp.ne.s32.totalorder %s38, %s41
    %p50 = scmp.eq.s32.totalorder %s19, 3
    %p51 = por %p49, %p50
    %p52 = scmp.ne.s32.totalorder %s41, %s42
    %p53 = scmp.eq.s32.totalorder %s19, 0
    %p54 = por %p52, %p53
    %p55 = scmp.ne.s32.totalorder %s41, %s42
    %p56 = scmp.eq.s32.totalorder %s20, 3
    %p57 = por %p55, %p56
    %p59 = scmp.ne.s32.totalorder %s42, %s58
    %p60 = scmp.eq.s32.totalorder %s20, 0
    %p61 = por %p59, %p60
    %s63 = sadd.s32 %s62, 1
    %p66 = scmp.eq.s32.totalorder %s14, 3
    %p67 = scmp.ne.s32.totalorder %s62, %s64
    %p68 = scmp.eq.s32.totalorder %s14, 0
    %p69 = por %p67, %p68
    %p70 = scmp.ne.s32.totalorder %s62, %s64
    %p71 = scmp.eq.s32.totalorder %s19, 3
    %p72 = por %p70, %p71
    %p73 = scmp.ne.s32.totalorder %s64, %s65
    %p74 = scmp.eq.s32.totalorder %s19, 0
    %p75 = por %p73, %p74
    %p76 = scmp.ne.s32.totalorder %s64, %s65
    %p77 = scmp.eq.s32.totalorder %s20, 3
    %p78 = por %p76, %p77
    %p80 = scmp.ne.s32.totalorder %s65, %s79
    %p81 = scmp.eq.s32.totalorder %s20, 0
    %p82 = por %p80, %p81
    %s84 = sadd.s32 %s83, 1
    %p87 = scmp.eq.s32.totalorder %s14, 3
    %p88 = scmp.ne.s32.totalorder %s83, %s85
    %p89 = scmp.eq.s32.totalorder %s14, 0
    %p90 = por %p88, %p89
    %p91 = scmp.ne.s32.totalorder %s83, %s85
    %p92 = scmp.eq.s32.totalorder %s19, 3
    %p93 = por %p91, %p92
    %p94 = scmp.ne.s32.totalorder %s85, %s86
    %p95 = scmp.eq.s32.totalorder %s19, 0
    %p96 = por %p94, %p95
    %p97 = scmp.ne.s32.totalorder %s85, %s86
    %p98 = scmp.eq.s32.totalorder %s20, 3
    %p99 = por %p97, %p98
    %p101 = scmp.ne.s32.totalorder %s86, %s100
    %p102 = scmp.eq.s32.totalorder %s20, 0
    %p103 = por %p101, %p102
    %s105 = sadd.s32 %s104, 1
    %p108 = scmp.eq.s32.totalorder %s14, 3
    %p109 = scmp.ne.s32.totalorder %s104, %s106
    %p110 = scmp.eq.s32.totalorder %s14, 0
    %p111 = por %p109, %p110
    %p112 = scmp.ne.s32.totalorder %s104, %s106
    %p113 = scmp.eq.s32.totalorder %s19, 3
    %p114 = por %p112, %p113
    %p115 = scmp.ne.s32.totalorder %s106, %s107
    %p116 = scmp.eq.s32.totalorder %s19, 0
    %p117 = por %p115, %p116
    %p118 = scmp.ne.s32.totalorder %s106, %s107
    %p119 = scmp.eq.s32.totalorder %s20, 3
    %p120 = por %p118, %p119
    %p122 = scmp.ne.s32.totalorder %s107, %s121
    %p123 = scmp.eq.s32.totalorder %s20, 0
    %p124 = por %p122, %p123
    %s125 = ssub.s32 %s22, %s29
    %p126 = scmp.eq.s32.totalorder %s125, 0
    %s128 = sadd.s32 %s127, 1
    %s129 = scalar_select %p126, %s127, %s128
    %p132 = pneg %p126
    %p133 = scmp.eq.s32.totalorder %s14, 3
    %p134 = por %p132, %p133
    %p135 = scmp.ne.s32.totalorder %s127, %s130
    %p136 = scmp.eq.s32.totalorder %s14, 0
    %p137 = por %p135, %p136
    %p138 = scmp.ne.s32.totalorder %s127, %s130
    %p139 = scmp.eq.s32.totalorder %s19, 3
    %p140 = por %p138, %p139
    %p141 = scmp.ne.s32.totalorder %s130, %s131
    %p142 = scmp.eq.s32.totalorder %s19, 0
    %p143 = por %p141, %p142
    %p144 = scmp.ne.s32.totalorder %s130, %s131
    %p145 = scmp.eq.s32.totalorder %s20, 3
    %p146 = por %p144, %p145
    %p148 = scmp.ne.s32.totalorder %s131, %s147
    %p149 = scmp.eq.s32.totalorder %s20, 0
    %p150 = por %p148, %p149
    %s151 = ssub.s32 %s21, %s33
    %s152 = ssub.s32 %s22, %s29
    %s153 = sor.u32 %s151, %s152
    %p154 = scmp.eq.s32.totalorder %s153, 0
    %s156 = sadd.s32 %s155, 1
    %s157 = scalar_select %p154, %s155, %s156
    %p160 = pneg %p154
    %p161 = scmp.eq.s32.totalorder %s14, 3
    %p162 = por %p160, %p161
    %p163 = scmp.ne.s32.totalorder %s155, %s158
    %p164 = scmp.eq.s32.totalorder %s14, 0
    %p165 = por %p163, %p164
    %p166 = scmp.ne.s32.totalorder %s155, %s158
    %p167 = scmp.eq.s32.totalorder %s19, 3
    %p168 = por %p166, %p167
    %p169 = scmp.ne.s32.totalorder %s158, %s159
    %p170 = scmp.eq.s32.totalorder %s19, 0
    %p171 = por %p169, %p170
    %p172 = scmp.ne.s32.totalorder %s158, %s159
    %p173 = scmp.eq.s32.totalorder %s20, 3
    %p174 = por %p172, %p173
    %p176 = scmp.ne.s32.totalorder %s159, %s175
    %p177 = scmp.eq.s32.totalorder %s20, 0
    %p178 = por %p176, %p177
    %s179 = ssub.s32 %s21, %s33
    %s180 = ssub.s32 %s22, %s29
    %s181 = sor.u32 %s179, %s180
    %p182 = scmp.eq.s32.totalorder %s181, 0
    %s184 = sadd.s32 %s183, 1
    %s185 = scalar_select %p182, %s183, %s184
    %p188 = pneg %p182
    %p189 = scmp.eq.s32.totalorder %s14, 3
    %p190 = por %p188, %p189
    %p191 = scmp.ne.s32.totalorder %s183, %s186
    %p192 = scmp.eq.s32.totalorder %s14, 0
    %p193 = por %p191, %p192
    %p194 = scmp.ne.s32.totalorder %s183, %s186
    %p195 = scmp.eq.s32.totalorder %s19, 3
    %p196 = por %p194, %p195
    %p197 = scmp.ne.s32.totalorder %s186, %s187
    %p198 = scmp.eq.s32.totalorder %s19, 0
    %p199 = por %p197, %p198
    %p200 = scmp.ne.s32.totalorder %s186, %s187
    %p201 = scmp.eq.s32.totalorder %s20, 3
    %p202 = por %p200, %p201
    %p204 = scmp.ne.s32.totalorder %s187, %s203
    %p205 = scmp.eq.s32.totalorder %s20, 0
    %p206 = por %p204, %p205
    %s207 = ssub.s32 %s21, %s33
    %s208 = ssub.s32 %s22, %s29
    %s209 = sor.u32 %s207, %s208
    %p210 = scmp.eq.s32.totalorder %s209, 0
    %s212 = sadd.s32 %s211, 1
    %s213 = scalar_select %p210, %s211, %s212
    %p216 = pneg %p210
    %p217 = scmp.eq.s32.totalorder %s14, 3
    %p218 = por %p216, %p217
    %p219 = scmp.ne.s32.totalorder %s211, %s214
    %p220 = scmp.eq.s32.totalorder %s14, 0
    %p221 = por %p219, %p220
    %p222 = scmp.ne.s32.totalorder %s211, %s214
    %p223 = scmp.eq.s32.totalorder %s19, 3
    %p224 = por %p222, %p223
    %p225 = scmp.ne.s32.totalorder %s214, %s215
    %p226 = scmp.eq.s32.totalorder %s19, 0
    %p227 = por %p225, %p226
    %p228 = scmp.ne.s32.totalorder %s214, %s215
    %p229 = scmp.eq.s32.totalorder %s20, 3
    %p230 = por %p228, %p229
    %p232 = scmp.ne.s32.totalorder %s215, %s231
    %p233 = scmp.eq.s32.totalorder %s20, 0
    %p234 = por %p232, %p233
    %p235 = scmp.le.s32.totalorder 1, %s14
    %p236 = scmp.lt.s32.totalorder %s14, 5
    %p237 = pnand %p235, %p236
    %p238 = pneg %p237
    // Predicated region
    $region9: #{tpu_custom_call.1} parent=5 // pred_check
      _
    $region10: #{tpu_custom_call.1} parent=5 // pred_check_branch
      %240 = sbr.rel (%p237) target = $region12
    $region11: #{tpu_custom_call.1} parent=5 // pred_region
      %s241 = ssub.s32 %s14, 1
      // Predicated region
      $region13: #{tpu_custom_call.1} parent=11 // pred_check
        %p242 = pneg %p75
      $region14: #{tpu_custom_call.1} parent=11 // pred_check_branch
        %244 = sbr.rel (%p242) target = $region16
      $region15: #{tpu_custom_call.1} parent=11 // pred_region
        _
      $region16: #{tpu_custom_call.1} parent=11 // pred_fallthru
        _
      // Predicated region
      $region17: #{tpu_custom_call.1} parent=11 // pred_check
        %p245 = pneg %p96
      $region18: #{tpu_custom_call.1} parent=11 // pred_check_branch
        %247 = sbr.rel (%p245) target = $region20
      $region19: #{tpu_custom_call.1} parent=11 // pred_region
        _
      $region20: #{tpu_custom_call.1} parent=11 // pred_fallthru
        _
      // Predicated region
      $region21: #{tpu_custom_call.1} parent=11 // pred_check
        %p248 = pneg %p117
      $region22: #{tpu_custom_call.1} parent=11 // pred_check_branch
        %250 = sbr.rel (%p248) target = $region24
      $region23: #{tpu_custom_call.1} parent=11 // pred_region
        _
      $region24: #{tpu_custom_call.1} parent=11 // pred_fallthru
        _
    $region12: #{tpu_custom_call.1} parent=5 // pred_fallthru
      _
    %p251 = scmp.lt.s32.totalorder %s14, 4
    // Predicated region
    $region25: #{tpu_custom_call.1} parent=5 // pred_check
      %p252 = pneg %p251
    $region26: #{tpu_custom_call.1} parent=5 // pred_check_branch
      %254 = sbr.rel (%p252) target = $region28
    $region27: #{tpu_custom_call.1} parent=5 // pred_region
      // Predicated region
      $region29: #{tpu_custom_call.1} parent=27 // pred_check
        %p255 = pneg %p48
      $region30: #{tpu_custom_call.1} parent=27 // pred_check_branch
        %257 = sbr.rel (%p255) target = $region32
      $region31: #{tpu_custom_call.1} parent=27 // pred_region
        %s258 = smul.u32 4, %s22
        %p259 = scmp.lt.s32.totalorder %s21, 1
        %s260 = scalar_select %p259, %s21, 1
        %p261 = scmp.lt.s32.totalorder %s258, 7
        %s262 = scalar_select %p261, %s258, 7
        %s263 = smul.addr %s260, 8
        %s264 = sadd.s32 %s262, %s263
        %s265 = smul.addr %s264, 8
        %s266 = scalar_lea.vmem %s0, %s265
        %s267 = smul.u32 4, %s22
      $region32: #{tpu_custom_call.1} parent=27 // pred_fallthru
        _
      // Predicated region
      $region33: #{tpu_custom_call.1} parent=27 // pred_check
        %p268 = pneg %p137
      $region34: #{tpu_custom_call.1} parent=27 // pred_check_branch
        %270 = sbr.rel (%p268) target = $region36
      $region35: #{tpu_custom_call.1} parent=27 // pred_region
        %s271 = smul.u32 4, %s22
        %p272 = scmp.lt.s32.totalorder %s271, 7
        %s273 = scalar_select %p272, %s271, 7
        %s274 = smul.addr %s273, 8
        %s275 = scalar_lea.vmem %s4, %s274
        %s276 = smul.u32 4, %s22
      $region36: #{tpu_custom_call.1} parent=27 // pred_fallthru
        _
    $region28: #{tpu_custom_call.1} parent=5 // pred_fallthru
      _
    %p277 = scmp.le.s32.totalorder 1, %s14
    %p278 = scmp.lt.s32.totalorder %s14, 5
    %p279 = pnand %p277, %p278
    %p280 = pneg %p279
    // Predicated region
    $region37: #{tpu_custom_call.1} parent=5 // pred_check
      _
    $region38: #{tpu_custom_call.1} parent=5 // pred_check_branch
      %282 = sbr.rel (%p279) target = $region40
    $region39: #{tpu_custom_call.1} parent=5 // pred_region
      %s283 = ssub.s32 %s14, 1
      %s284 = smul.u32 4, %s24
      %p285 = scmp.lt.s32.totalorder %s23, 1
      %s286 = scalar_select %p285, %s23, 1
      %p287 = scmp.lt.s32.totalorder %s284, 7
      %s288 = scalar_select %p287, %s284, 7
      %s289 = smul.addr %s286, 8
      %s290 = sadd.s32 %s288, %s289
      %s291 = smul.addr %s290, 8
      %s292 = scalar_lea.vmem %s0, %s291
      %p293 = pneg %p54
      %p294 = pneg %p51
      %p295 = pneg %p75
      %p296 = pneg %p72
      %p297 = pneg %p96
      %p298 = pneg %p93
      %p299 = pneg %p117
      %p300 = pneg %p114
      %s301 = smul.u32 4, %s24
      %p302 = scmp.lt.s32.totalorder %s301, 7
      %s303 = scalar_select %p302, %s301, 7
      %s304 = smul.addr %s303, 8
      %s305 = scalar_lea.vmem %s4, %s304
      %p306 = pneg %p143
      %p307 = pneg %p140
      %p308 = pneg %p171
      %p309 = pneg %p168
      %s310 = smul.u32 4, %s24
      %p311 = scmp.lt.s32.totalorder %s23, 1
      %s312 = scalar_select %p311, %s23, 1
      %p313 = scmp.lt.s32.totalorder %s310, 7
      %s314 = scalar_select %p313, %s310, 7
      %s315 = smul.addr %s312, 8
      %s316 = sadd.s32 %s314, %s315
      %s317 = smul.addr %s316, 4
      %s318 = scalar_lea.vmem %s5, %s317
      %p319 = pneg %p199
      %p320 = pneg %p196
      %s321 = smul.u32 4, %s24
      %p322 = scmp.lt.s32.totalorder %s23, 1
      %s323 = scalar_select %p322, %s23, 1
      %p324 = scmp.lt.s32.totalorder %s321, 7
      %s325 = scalar_select %p324, %s321, 7
      %s326 = smul.addr %s323, 8
      %s327 = sadd.s32 %s325, %s326
      %s328 = smul.addr %s327, 4
      %s329 = scalar_lea.vmem %s6, %s328
      %p330 = pneg %p227
      %p331 = pneg %p224
      %s332 = smul.u32 4, %s24
      %p333 = scmp.lt.s32.totalorder %s23, 1
      %s334 = scalar_select %p333, %s23, 1
      %p335 = scmp.lt.s32.totalorder %s332, 7
      %s336 = scalar_select %p335, %s332, 7
      %s337 = smul.addr %s334, 8
      %s338 = sadd.s32 %s336, %s337
      %s339 = smul.addr %s338, 4
      %s340 = scalar_lea.vmem %s7, %s339
      %s341 = smul.u32 4, %s24
      %p342 = scmp.lt.s32.totalorder %s23, 1
      %s343 = scalar_select %p342, %s23, 1
      %p344 = scmp.lt.s32.totalorder %s341, 7
      %s345 = scalar_select %p344, %s341, 7
      %s346 = smul.addr %s343, 8
      %s347 = sadd.s32 %s345, %s346
      %s348 = smul.addr %s347, 8
      %s349 = scalar_lea.vmem %s0, %s348
      %s350 = smul.u32 4, %s24
      %s351 = smul.u32 4, %s24
      %p352 = scmp.lt.s32.totalorder %s351, 7
      %s353 = scalar_select %p352, %s351, 7
      %s354 = smul.addr %s353, 8
      %s355 = scalar_lea.vmem %s4, %s354
      %s356 = smul.u32 4, %s24
      %s357 = smul.u32 4, %s24
      %p358 = scmp.lt.s32.totalorder %s23, 1
      %s359 = scalar_select %p358, %s23, 1
      %p360 = scmp.lt.s32.totalorder %s357, 7
      %s361 = scalar_select %p360, %s357, 7
      %s362 = smul.addr %s359, 8
      %s363 = sadd.s32 %s361, %s362
      %s364 = smul.addr %s363, 4
      %s365 = scalar_lea.vmem %s5, %s364
      %s366 = smul.u32 4, %s24
      %s367 = smul.u32 4, %s24
      %p368 = scmp.lt.s32.totalorder %s23, 1
      %s369 = scalar_select %p368, %s23, 1
      %p370 = scmp.lt.s32.totalorder %s367, 7
      %s371 = scalar_select %p370, %s367, 7
      %s372 = smul.addr %s369, 8
      %s373 = sadd.s32 %s371, %s372
      %s374 = smul.addr %s373, 4
      %s375 = scalar_lea.vmem %s6, %s374
      %s376 = smul.u32 4, %s24
      %s377 = smul.u32 4, %s24
      %p378 = scmp.lt.s32.totalorder %s23, 1
      %s379 = scalar_select %p378, %s23, 1
      %p380 = scmp.lt.s32.totalorder %s377, 7
      %s381 = scalar_select %p380, %s377, 7
      %s382 = smul.addr %s379, 8
      %s383 = sadd.s32 %s381, %s382
      %s384 = smul.addr %s383, 4
      %s385 = scalar_lea.vmem %s7, %s384
      %s386 = smul.u32 4, %s24
      %v388 = vld [vmem:[%s349] sm:$0xff]
      %v389 = vld [vmem:[%s349 + $0x8] sm:$0xff]
      %v390 = vld [vmem:[%s349 + $0x10] sm:$0xff]
      %v391 = vld [vmem:[%s349 + $0x18] sm:$0xff]
      %v392 = vld [vmem:[%s1] sm:$0x1]
      %v393 = vld [vmem:[%s2] sm:$0x1]
      %vm394 = vcmask 261120
      %v395 = vsel %vm394, %v388, 0.0
      %396 = vadd.xlane.f32.xlu0 %v395
      %v397 = vpop.xlane.xlu0 %396
      %v398 = vsel %vm394, %v389, 0.0
      %399 = vadd.xlane.f32.xlu0 %v398
      %v400 = vpop.xlane.xlu0 %399
      %v401 = vsel %vm394, %v390, 0.0
      %402 = vadd.xlane.f32.xlu0 %v401
      %v403 = vpop.xlane.xlu0 %402
      %v404 = vsel %vm394, %v391, 0.0
      %405 = vadd.xlane.f32.xlu0 %v404
      %v406 = vpop.xlane.xlu0 %405
      %v407 = vrcp.pop 32.0
      %v408 = vmul.f32 32.0, %v407
      %v409 = vsub.f32 1.0, %v408
      %v410 = vmul.f32 %v407, %v409
      %v411 = vadd.f32 %v407, %v410
      %vm412 = vweird.f32 %v407
      %v413 = vsel %vm412, %v407, %v411
      %v414 = vmul.f32 %v397, %v413
      %v415 = vmul.f32 %v400, %v413
      %v416 = vmul.f32 %v403, %v413
      %v417 = vmul.f32 %v406, %v413
      %v418 = vsub.f32 %v388, %v414
      %v419 = vsub.f32 %v389, %v415
      %v420 = vsub.f32 %v390, %v416
      %v421 = vsub.f32 %v391, %v417
      %v422 = vmul.f32 %v418, %v418
      %v423 = vmul.f32 %v419, %v419
      %v424 = vmul.f32 %v420, %v420
      %v425 = vmul.f32 %v421, %v421
      %v426 = vsel %vm394, %v422, 0.0
      %427 = vadd.xlane.f32.xlu0 %v426
      %v428 = vpop.xlane.xlu0 %427
      %v429 = vsel %vm394, %v423, 0.0
      %430 = vadd.xlane.f32.xlu0 %v429
      %v431 = vpop.xlane.xlu0 %430
      %v432 = vsel %vm394, %v424, 0.0
      %433 = vadd.xlane.f32.xlu0 %v432
      %v434 = vpop.xlane.xlu0 %433
      %v435 = vsel %vm394, %v425, 0.0
      %436 = vadd.xlane.f32.xlu0 %v435
      %v437 = vpop.xlane.xlu0 %436
      %v438 = vmul.f32 %v428, %v413
      %v439 = vmul.f32 %v431, %v413
      %v440 = vmul.f32 %v434, %v413
      %v441 = vmul.f32 %v437, %v413
      %v442 = vadd.f32 %v438, 1e-05
      %v443 = vadd.f32 %v439, 1e-05
      %v444 = vadd.f32 %v440, 1e-05
      %v445 = vadd.f32 %v441, 1e-05
      %v446 = vrsqrt.pop %v442
      %v447 = vmul.f32 %v446, %v442
      %v448 = vmul.f32 %v447, %v446
      %v449 = vmul.f32 0.5, %v448
      %v450 = vsub.f32 1.5, %v449
      %v451 = vmul.f32 %v446, %v450
      %vm452 = vweird.f32 %v442
      %vm453 = vweird.f32 %v446
      %vm454 = vmor %vm452, %vm453
      %v455 = vsel %vm454, %v446, %v451
      %v456 = vrsqrt.pop %v443
      %v457 = vmul.f32 %v456, %v443
      %v458 = vmul.f32 %v457, %v456
      %v459 = vmul.f32 0.5, %v458
      %v460 = vsub.f32 1.5, %v459
      %v461 = vmul.f32 %v456, %v460
      %vm462 = vweird.f32 %v443
      %vm463 = vweird.f32 %v456
      %vm464 = vmor %vm462, %vm463
      %v465 = vsel %vm464, %v456, %v461
      %v466 = vrsqrt.pop %v444
      %v467 = vmul.f32 %v466, %v444
      %v468 = vmul.f32 %v467, %v466
      %v469 = vmul.f32 0.5, %v468
      %v470 = vsub.f32 1.5, %v469
      %v471 = vmul.f32 %v466, %v470
      %vm472 = vweird.f32 %v444
      %vm473 = vweird.f32 %v466
      %vm474 = vmor %vm472, %vm473
      %v475 = vsel %vm474, %v466, %v471
      %v476 = vrsqrt.pop %v445
      %v477 = vmul.f32 %v476, %v445
      %v478 = vmul.f32 %v477, %v476
      %v479 = vmul.f32 0.5, %v478
      %v480 = vsub.f32 1.5, %v479
      %v481 = vmul.f32 %v476, %v480
      %vm482 = vweird.f32 %v445
      %vm483 = vweird.f32 %v476
      %vm484 = vmor %vm482, %vm483
      %v485 = vsel %vm484, %v476, %v481
      %v486 = vmul.f32 %v418, %v455
      %v487 = vmul.f32 %v419, %v465
      %v488 = vmul.f32 %v420, %v475
      %v489 = vmul.f32 %v421, %v485
      %v491 = vperm.slane %v392, 0
      %v493 = vmul.f32 %v486, %v491
      %v494 = vmul.f32 %v487, %v491
      %v495 = vmul.f32 %v488, %v491
      %v496 = vmul.f32 %v489, %v491
      %v498 = vperm.slane %v393, 0
      %v500 = vadd.f32 %v493, %v498
      %v501 = vadd.f32 %v494, %v498
      %v502 = vadd.f32 %v495, %v498
      %v503 = vadd.f32 %v496, %v498
      %v504 = vld [vmem:[%s3] sm:$0xf]
      %v505 = vld [vmem:[%s3 + $0x4] sm:$0xf]
      %v506 = vld [vmem:[%s3 + $0x8] sm:$0xf]
      %v507 = vld [vmem:[%s3 + $0xc] sm:$0xf]
      %v508 = vpack.c.bf16 %v501, %v500
      %v509 = vpack.c.bf16 %v503, %v502
      %v514 = vunpack.c.l.b16 %v504
      %v515 = vunpack.c.l.b16 %v505
      %v516 = vunpack.c.l.b16 %v506
      %v517 = vunpack.c.l.b16 %v507
      %v518 = vpack.c.b16 %v515, %v514
      %v519 = vpack.c.b16 %v517, %v516
      %v523 = vsel %vm394, %v508, 0
      %v526 = vsel %vm394, %v509, 0
      %528 = vmatpush.bf16.msra.mxu0 0
      %529 = vmatpush.bf16.msra.mxu0 0
      %530 = vmatpush.bf16.msra.mxu0 0
      %531 = vmatpush.bf16.msra.mxu0 0
      %532 = vmatpush.bf16.msra.mxu0 0
      %533 = vmatpush.bf16.msra.mxu0 0
      %534 = vmatpush.bf16.msra.mxu0 %v519
      %535 = vmatpush.bf16.msra.mxu0 %v518
      %536 = vmatmul.bf16.gmra.mxu0 %v523
      %v537 = vpop.f32.mrf.mxu0
      %v538 = vadd.f32 0.0, %v537
      %v539 = vpop.f32.mrf.mxu0
      %v540 = vadd.f32 0.0, %v539
      %541 = vmatmul.bf16.gmra.mxu0 %v526
      %v542 = vpop.f32.mrf.mxu0
      %v543 = vadd.f32 0.0, %v542
      %v544 = vpop.f32.mrf.mxu0
      %v545 = vadd.f32 0.0, %v544
      %546 = vdwg.mxu0
      %v547 = vld [vmem:[%s355] sm:$0xff]
      %v548 = vld [vmem:[%s355 + $0x8] sm:$0xff]
      %v549 = vld [vmem:[%s355 + $0x10] sm:$0xff]
      %v550 = vld [vmem:[%s355 + $0x18] sm:$0xff]
      %v551 = vadd.f32 %v538, %v547
      %v552 = vadd.f32 %v540, %v548
      %v553 = vadd.f32 %v543, %v549
      %v554 = vadd.f32 %v545, %v550
      %v555 = vpack.c.bf16 %v551, %v551
      %v556 = vpack.c.bf16 %v552, %v552
      %v557 = vpack.c.bf16 %v553, %v553
      %v558 = vpack.c.bf16 %v554, %v554
      %vm559 = vcmask 257024
      %560 = vst.msk [vmem:[%s365] sm:$0xf] %vm559, %v555
      %561 = vst.msk [vmem:[%s365 + $0x4] sm:$0xf] %vm559, %v556
      %562 = vst.msk [vmem:[%s365 + $0x8] sm:$0xf] %vm559, %v557
      %563 = vst.msk [vmem:[%s365 + $0xc] sm:$0xf] %vm559, %v558
      %568 = vrot.lane.b32.xlu0 %v547, 32
      %v569 = vpop.permute.xlu0 %568
      %570 = vrot.lane.b32.xlu0 %v548, 32
      %v571 = vpop.permute.xlu0 %570
      %572 = vrot.lane.b32.xlu0 %v549, 32
      %v573 = vpop.permute.xlu0 %572
      %574 = vrot.lane.b32.xlu0 %v550, 32
      %v575 = vpop.permute.xlu0 %574
      %v580 = vadd.f32 %v538, %v569
      %v581 = vadd.f32 %v540, %v571
      %v582 = vadd.f32 %v543, %v573
      %v583 = vadd.f32 %v545, %v575
      %v584 = vpack.c.bf16 %v580, %v580
      %v585 = vpack.c.bf16 %v581, %v581
      %v586 = vpack.c.bf16 %v582, %v582
      %v587 = vpack.c.bf16 %v583, %v583
      %592 = vrot.lane.b32.xlu0 %v584, 96
      %v593 = vpop.permute.xlu0 %592
      %594 = vrot.lane.b32.xlu0 %v585, 96
      %v595 = vpop.permute.xlu0 %594
      %596 = vrot.lane.b32.xlu0 %v586, 96
      %v597 = vpop.permute.xlu0 %596
      %598 = vrot.lane.b32.xlu0 %v587, 96
      %v599 = vpop.permute.xlu0 %598
      %604 = vst.msk [vmem:[%s375] sm:$0xf] %vm559, %v593
      %605 = vst.msk [vmem:[%s375 + $0x4] sm:$0xf] %vm559, %v595
      %606 = vst.msk [vmem:[%s375 + $0x8] sm:$0xf] %vm559, %v597
      %607 = vst.msk [vmem:[%s375 + $0xc] sm:$0xf] %vm559, %v599
      %v608 = vpack.c.bf16 %v538, %v538
      %v609 = vpack.c.bf16 %v540, %v540
      %v610 = vpack.c.bf16 %v543, %v543
      %v611 = vpack.c.bf16 %v545, %v545
      %616 = vrot.lane.b32.xlu0 %v608, 64
      %v617 = vpop.permute.xlu0 %616
      %618 = vrot.lane.b32.xlu0 %v609, 64
      %v619 = vpop.permute.xlu0 %618
      %620 = vrot.lane.b32.xlu0 %v610, 64
      %v621 = vpop.permute.xlu0 %620
      %622 = vrot.lane.b32.xlu0 %v611, 64
      %v623 = vpop.permute.xlu0 %622
      %628 = vst.msk [vmem:[%s385] sm:$0xf] %vm559, %v617
      %629 = vst.msk [vmem:[%s385 + $0x4] sm:$0xf] %vm559, %v619
      %630 = vst.msk [vmem:[%s385 + $0x8] sm:$0xf] %vm559, %v621
      %631 = vst.msk [vmem:[%s385 + $0xc] sm:$0xf] %vm559, %v623
      %s632 = smul.u32 4, %s24
      %p633 = scmp.lt.s32.totalorder %s23, 1
      %s634 = scalar_select %p633, %s23, 1
      %p635 = scmp.lt.s32.totalorder %s632, 7
      %s636 = scalar_select %p635, %s632, 7
      %s637 = smul.addr %s634, 8
      %s638 = sadd.s32 %s636, %s637
      %s639 = smul.addr %s638, 4
      %s640 = scalar_lea.vmem %s5, %s639
      %s641 = smul.u32 4, %s24
      %p642 = scmp.lt.s32.totalorder %s23, 1
      %s643 = scalar_select %p642, %s23, 1
      %p644 = scmp.lt.s32.totalorder %s641, 7
      %s645 = scalar_select %p644, %s641, 7
      %s646 = smul.addr %s643, 8
      %s647 = sadd.s32 %s645, %s646
      %s648 = smul.addr %s647, 4
      %s649 = scalar_lea.vmem %s6, %s648
      %s650 = smul.u32 4, %s24
      %p651 = scmp.lt.s32.totalorder %s23, 1
      %s652 = scalar_select %p651, %s23, 1
      %p653 = scmp.lt.s32.totalorder %s650, 7
      %s654 = scalar_select %p653, %s650, 7
      %s655 = smul.addr %s652, 8
      %s656 = sadd.s32 %s654, %s655
      %s657 = smul.addr %s656, 4
      %s658 = scalar_lea.vmem %s7, %s657
      // Predicated region
      $region41: #{tpu_custom_call.1} parent=39 // pred_check
        %p659 = pneg %p168
      $region42: #{tpu_custom_call.1} parent=39 // pred_check_branch
        %661 = sbr.rel (%p659) target = $region44
      $region43: #{tpu_custom_call.1} parent=39 // pred_region
        %s662 = smul.u32 4, %s24
      $region44: #{tpu_custom_call.1} parent=39 // pred_fallthru
        _
      // Predicated region
      $region45: #{tpu_custom_call.1} parent=39 // pred_check
        %p663 = pneg %p196
      $region46: #{tpu_custom_call.1} parent=39 // pred_check_branch
        %665 = sbr.rel (%p663) target = $region48
      $region47: #{tpu_custom_call.1} parent=39 // pred_region
        %s666 = smul.u32 4, %s24
      $region48: #{tpu_custom_call.1} parent=39 // pred_fallthru
        _
      // Predicated region
      $region49: #{tpu_custom_call.1} parent=39 // pred_check
        %p667 = pneg %p224
      $region50: #{tpu_custom_call.1} parent=39 // pred_check_branch
        %669 = sbr.rel (%p667) target = $region52
      $region51: #{tpu_custom_call.1} parent=39 // pred_region
        %s670 = smul.u32 4, %s24
      $region52: #{tpu_custom_call.1} parent=39 // pred_fallthru
        _
    $region40: #{tpu_custom_call.1} parent=5 // pred_fallthru
      _
    %p671 = scmp.le.s32.totalorder 2, %s14
    // Predicated region
    $region53: #{tpu_custom_call.1} parent=5 // pred_check
      %p672 = pneg %p671
    $region54: #{tpu_custom_call.1} parent=5 // pred_check_branch
      %674 = sbr.rel (%p672) target = $region56
    $region55: #{tpu_custom_call.1} parent=5 // pred_region
      %s675 = ssub.s32 %s14, 2
      // Predicated region
      $region57: #{tpu_custom_call.1} parent=55 // pred_check
        %p676 = pneg %p174
      $region58: #{tpu_custom_call.1} parent=55 // pred_check_branch
        %678 = sbr.rel (%p676) target = $region60
      $region59: #{tpu_custom_call.1} parent=55 // pred_region
        %s679 = smul.u32 4, %s26
        %p680 = scmp.lt.s32.totalorder %s25, 1
        %s681 = scalar_select %p680, %s25, 1
        %p682 = scmp.lt.s32.totalorder %s679, 7
        %s683 = scalar_select %p682, %s679, 7
        %s684 = smul.addr %s681, 8
        %s685 = sadd.s32 %s683, %s684
        %s686 = smul.addr %s685, 4
        %s687 = scalar_lea.vmem %s5, %s686
      $region60: #{tpu_custom_call.1} parent=55 // pred_fallthru
        _
      // Predicated region
      $region61: #{tpu_custom_call.1} parent=55 // pred_check
        %p688 = pneg %p202
      $region62: #{tpu_custom_call.1} parent=55 // pred_check_branch
        %690 = sbr.rel (%p688) target = $region64
      $region63: #{tpu_custom_call.1} parent=55 // pred_region
        %s691 = smul.u32 4, %s26
        %p692 = scmp.lt.s32.totalorder %s25, 1
        %s693 = scalar_select %p692, %s25, 1
        %p694 = scmp.lt.s32.totalorder %s691, 7
        %s695 = scalar_select %p694, %s691, 7
        %s696 = smul.addr %s693, 8
        %s697 = sadd.s32 %s695, %s696
        %s698 = smul.addr %s697, 4
        %s699 = scalar_lea.vmem %s6, %s698
      $region64: #{tpu_custom_call.1} parent=55 // pred_fallthru
        _
      // Predicated region
      $region65: #{tpu_custom_call.1} parent=55 // pred_check
        %p700 = pneg %p230
      $region66: #{tpu_custom_call.1} parent=55 // pred_check_branch
        %702 = sbr.rel (%p700) target = $region68
      $region67: #{tpu_custom_call.1} parent=55 // pred_region
        %s703 = smul.u32 4, %s26
        %p704 = scmp.lt.s32.totalorder %s25, 1
        %s705 = scalar_select %p704, %s25, 1
        %p706 = scmp.lt.s32.totalorder %s703, 7
        %s707 = scalar_select %p706, %s703, 7
        %s708 = smul.addr %s705, 8
        %s709 = sadd.s32 %s707, %s708
        %s710 = smul.addr %s709, 4
        %s711 = scalar_lea.vmem %s7, %s710
      $region68: #{tpu_custom_call.1} parent=55 // pred_fallthru
        _
    $region56: #{tpu_custom_call.1} parent=5 // pred_fallthru
      _
  $region6: #{tpu_custom_call.1} parent=0 // loop_footer
    %s18 = sadd.s32 1, %s14
  $region7: #{tpu_custom_call.1} parent=0 // loop_footer_branch
    %13 = sbr.rel target = $region3
  $region8: #{tpu_custom_call.1} parent=0 // loop_exit
    _

</llo_original>
